<compile_context>
chip_gen: v5e
topology: v5e:2x2
jax: 0.10.0
libtpu: 0.0.40
codegen_flags: <defaults>
</compile_context>

<pallas_src>
import jax
import jax.numpy as jnp
from jax.experimental import pallas as pl
from jax.experimental.pallas import tpu as pltpu


def _const_block_spec(block_shape, index_map):
    """BlockSpec for a grid-invariant operand; single-buffer it when the API supports it."""
    try:
        return pl.BlockSpec(block_shape, index_map, pipeline_mode=pl.Buffered(1))
    except (AttributeError, TypeError):
        return pl.BlockSpec(block_shape, index_map)


# --------------------------------------------------------------------------------------
# Main kernel: LayerNorm (no affine, eps=1e-6) + scale + final linear on a (tm, H) tile.
# Shift and the linear bias are pre-folded into a per-batch f32 bias outside the kernel.
# --------------------------------------------------------------------------------------
def final_layer_kernel(x_ref, scale1_ref, bias_ref, w_lin_ref, o_ref):
    """
    x_ref:      (1, tm, H)  input rows for one (batch, row-tile) grid point
    scale1_ref: (1, 1, H)   per-batch (1 + scale), f32
    bias_ref:   (1, 1, O)   per-batch fused bias  shift @ W + b, f32
    w_lin_ref:  (H, O)      final linear weight (matmul dtype, grid-invariant)
    o_ref:      (1, tm, O)  output rows
    """
    h = x_ref.shape[-1]
    x = x_ref[0].astype(jnp.float32)                         # (tm, H) LN math in f32 (VPU)

    # One-pass LayerNorm statistics: var = E[x^2] - mean^2 (two independent reductions).
    inv_h = 1.0 / h
    mean = jnp.sum(x, axis=-1, keepdims=True) * inv_h
    mean_sq = jnp.sum(x * x, axis=-1, keepdims=True) * inv_h
    var = jnp.maximum(mean_sq - mean * mean, 0.0)
    xn = (x - mean) * jax.lax.rsqrt(var + 1e-6)

    # Modulate (shift already folded into the bias); feed the MXU in matmul dtype.
    # TODO(synk): on v7x the f32 elementwise chain could run in bf16 (bf16 VALU) for ~2x
    #             VPU throughput; kept in f32 here for v5e portability / accuracy.
    y = (xn * scale1_ref[0]).astype(w_lin_ref.dtype)         # (tm, H)

    out = jnp.dot(y, w_lin_ref[...], preferred_element_type=jnp.float32) + bias_ref[0]
    o_ref[0] = out.astype(o_ref.dtype)


# --------------------------------------------------------------------------------------
# Wrapper
# --------------------------------------------------------------------------------------
def final_layer_1d(x, t, w_ada, b_ada, w_lin, b_lin, *, matmul_dtype=jnp.bfloat16):
    """
    x: (B, T, H); t: (B, H); w_ada: (H, 2H) columns ordered [shift | scale];
    b_ada: (2H,); w_lin: (H, O); b_lin: (O,).
    """
    B, T, H = x.shape
    O = w_lin.shape[1]

    # ---- adaLN branch: tiny (B x H) SiLU + matmul, left to XLA fusion (perf review) ----
    t32 = t.astype(jnp.float32)
    silu_t = t32 * jax.nn.sigmoid(t32)
    mod = silu_t @ w_ada.astype(jnp.float32) + b_ada.astype(jnp.float32)     # (B, 2H)
    shift, scale = mod[:, :H], mod[:, H:]
    # Fold shift and the final-linear bias into a per-batch f32 bias (exact: final layer
    # is linear), and pre-add 1 to scale.
    bias_b = (shift @ w_lin.astype(jnp.float32)
              + b_lin.astype(jnp.float32)).reshape(B, 1, O)                  # (B, 1, O) f32
    scale1 = (1.0 + scale).reshape(B, 1, H).astype(jnp.float32)              # (B, 1, H) f32

    # ---- main kernel: (B, T-tiles) grid; no padding of T, no O padding, no post-slice ----
    tm = T if T <= 512 else 512            # 512 is a multiple of 16 (bf16 MXU feed)
    nt = pl.cdiv(T, tm)                    # partial last tile masked by Pallas
    w_lin_mm = w_lin.astype(matmul_dtype)

    itemsize = jnp.dtype(x.dtype).itemsize
    cost = pl.CostEstimate(
        flops=2 * B * T * H * O + 8 * B * T * H,
        transcendentals=B * T,                                  # rsqrt per row
        bytes_accessed=(B * T * H * itemsize
                        + H * O * jnp.dtype(matmul_dtype).itemsize
                        + B * (H + O) * 4
                        + B * T * O * itemsize),
    )

    out = pl.pallas_call(
        final_layer_kernel,
        out_shape=jax.ShapeDtypeStruct((B, T, O), x.dtype),
        grid_spec=pltpu.PrefetchScalarGridSpec(
            num_scalar_prefetch=0,
            grid=(B, nt),
            in_specs=[
                pl.BlockSpec((1, tm, H), lambda b, i: (b, i, 0)),    # x row tile
                pl.BlockSpec((1, 1, H), lambda b, i: (b, 0, 0)),     # 1 + scale (per batch)
                pl.BlockSpec((1, 1, O), lambda b, i: (b, 0, 0)),     # fused bias (per batch)
                _const_block_spec((H, O), lambda b, i: (0, 0)),      # w_lin (resident, 1-buf)
            ],
            out_specs=pl.BlockSpec((1, tm, O), lambda b, i: (b, i, 0)),
        ),
        compiler_params=pltpu.CompilerParams(
            # Both grid axes independent -> shardable across the 2 TensorCores on v7x.
            dimension_semantics=("parallel", "parallel"),
            vmem_limit_bytes=48 * 1024 * 1024,
        ),
        cost_estimate=cost,
    )(x, scale1, bias_b, w_lin_mm)

    return out


def final_layer_1d_ref(x, t, w_ada, b_ada, w_lin, b_lin):
    """Pure-JAX f32 reference matching the PyTorch module."""
    silu_t = t * jax.nn.sigmoid(t)
    mod = silu_t @ w_ada + b_ada
    H = x.shape[-1]
    shift, scale = mod[:, :H], mod[:, H:]
    mean = jnp.mean(x, axis=-1, keepdims=True)
    var = jnp.mean((x - mean) ** 2, axis=-1, keepdims=True)
    xn = (x - mean) / jnp.sqrt(var + 1e-6)
    y = xn * (1 + scale[:, None, :]) + shift[:, None, :]
    return y @ w_lin + b_lin


if __name__ == "__main__":
    B, T, H, O = 2, 8, 32, 16

    key = jax.random.PRNGKey(0)
    kx, kt, k1, k2, k3, k4 = jax.random.split(key, 6)

    x = jax.random.normal(kx, (B, T, H), dtype=jnp.float32)
    t = jax.random.normal(kt, (B, H), dtype=jnp.float32)

    # Deterministic parameter init (PyTorch-Linear-like uniform bounds), stored as (in, out).
    lim = 1.0 / jnp.sqrt(H)
    w_ada = jax.random.uniform(k1, (H, 2 * H), jnp.float32, -lim, lim)
    b_ada = jax.random.uniform(k2, (2 * H,), jnp.float32, -lim, lim)
    w_lin = jax.random.uniform(k3, (H, O), jnp.float32, -lim, lim)
    b_lin = jax.random.uniform(k4, (O,), jnp.float32, -lim, lim)

    out = jax.block_until_ready(final_layer_1d(x, t, w_ada, b_ada, w_lin, b_lin))
    ref = final_layer_1d_ref(x, t, w_ada, b_ada, w_lin, b_lin)

    assert out.shape == (B, T, O)
    # Final matmul is bf16-fed on the MXU (f32 accumulation); shift/bias stay in the f32
    # bias path, so tolerance vs the pure-f32 reference is modestly loosened.
    assert jnp.allclose(out, ref, atol=5e-2, rtol=5e-2), "Pallas kernel mismatch vs reference"

    print("KERNEL_OK")
</pallas_src>

<mosaic_0001>
module attributes {stable_mosaic.version = 11 : i64} {
  func.func @final_layer_kernel(%arg0: i32, %arg1: i32, %arg2: memref<1x8x32xf32, #tpu.memory_space<vmem>>, %arg3: memref<1x1x32xf32, #tpu.memory_space<vmem>>, %arg4: memref<1x1x16xf32, #tpu.memory_space<vmem>>, %arg5: memref<32x16xbf16, #tpu.memory_space<vmem>>, %arg6: memref<1x8x16xf32, #tpu.memory_space<vmem>>) attributes {dimension_semantics = [#tpu.dimension_semantics<parallel>, #tpu.dimension_semantics<parallel>], iteration_bounds = array<i64: 2, 1>, scalar_prefetch = 0 : i64, scratch_operands = 0 : i64, tpu.core_type = #tpu.core_type<tc>, window_params = [{transform_indices = @transform_0, window_bounds = array<i64: 1, 8, 32>}, {transform_indices = @transform_1, window_bounds = array<i64: 1, 1, 32>}, {transform_indices = @transform_2, window_bounds = array<i64: 1, 1, 16>}, {pipeline_mode = #tpu.pipeline_mode<synchronous>, transform_indices = @transform_3, window_bounds = array<i64: 32, 16>}, {transform_indices = @transform_4, window_bounds = array<i64: 1, 8, 16>}]} {
    %c0 = arith.constant 0 : index
    %c0_0 = arith.constant 0 : index
    %c0_1 = arith.constant 0 : index
    %0 = vector.load %arg2[%c0, %c0_0, %c0_1] : memref<1x8x32xf32, #tpu.memory_space<vmem>>, vector<1x8x32xf32>
    %1 = vector.shape_cast %0 : vector<1x8x32xf32> to vector<8x32xf32>
    %cst = arith.constant dense<0.000000e+00> : vector<8xf32>
    %2 = vector.multi_reduction <add>, %1, %cst [1] : vector<8x32xf32> to vector<8xf32>
    %3 = vector.shape_cast %2 : vector<8xf32> to vector<8x1xf32>
    %cst_2 = arith.constant 3.125000e-02 : f32
    %4 = vector.broadcast %cst_2 : f32 to vector<8x1xf32>
    %5 = arith.mulf %3, %4 : vector<8x1xf32>
    %6 = arith.mulf %1, %1 : vector<8x32xf32>
    %cst_3 = arith.constant dense<0.000000e+00> : vector<8xf32>
    %7 = vector.multi_reduction <add>, %6, %cst_3 [1] : vector<8x32xf32> to vector<8xf32>
    %8 = vector.shape_cast %7 : vector<8xf32> to vector<8x1xf32>
    %cst_4 = arith.constant 3.125000e-02 : f32
    %9 = vector.broadcast %cst_4 : f32 to vector<8x1xf32>
    %10 = arith.mulf %8, %9 : vector<8x1xf32>
    %11 = arith.mulf %5, %5 : vector<8x1xf32>
    %12 = arith.subf %10, %11 : vector<8x1xf32>
    %cst_5 = arith.constant 0.000000e+00 : f32
    %13 = vector.broadcast %cst_5 : f32 to vector<8x1xf32>
    %14 = arith.maximumf %12, %13 : vector<8x1xf32>
    %15 = vector.broadcast %5 : vector<8x1xf32> to vector<8x32xf32>
    %16 = arith.subf %1, %15 : vector<8x32xf32>
    %cst_6 = arith.constant 9.99999997E-7 : f32
    %17 = vector.broadcast %cst_6 : f32 to vector<8x1xf32>
    %18 = arith.addf %14, %17 : vector<8x1xf32>
    %19 = math.rsqrt %18 : vector<8x1xf32>
    %20 = vector.broadcast %19 : vector<8x1xf32> to vector<8x32xf32>
    %21 = arith.mulf %16, %20 : vector<8x32xf32>
    %c0_7 = arith.constant 0 : index
    %c0_8 = arith.constant 0 : index
    %c0_9 = arith.constant 0 : index
    %22 = vector.load %arg3[%c0_7, %c0_8, %c0_9] : memref<1x1x32xf32, #tpu.memory_space<vmem>>, vector<1x1x32xf32>
    %23 = vector.shape_cast %22 : vector<1x1x32xf32> to vector<1x32xf32>
    %24 = vector.broadcast %23 : vector<1x32xf32> to vector<8x32xf32>
    %25 = arith.mulf %21, %24 : vector<8x32xf32>
    %26 = arith.truncf %25 : vector<8x32xf32> to vector<8x32xbf16>
    %c0_10 = arith.constant 0 : index
    %c0_11 = arith.constant 0 : index
    %27 = vector.load %arg5[%c0_10, %c0_11] : memref<32x16xbf16, #tpu.memory_space<vmem>>, vector<32x16xbf16>
    %cst_12 = arith.constant dense<0.000000e+00> : vector<8x16xf32>
    %28 = tpu.matmul %26, %27, %cst_12 {dimension_numbers = #tpu.dot_dimension_numbers<[1], [0], [0], [1], [0, 0, 1, 1], [], []>} : vector<8x32xbf16>, vector<32x16xbf16>, vector<8x16xf32> -> vector<8x16xf32>
    %c0_13 = arith.constant 0 : index
    %c0_14 = arith.constant 0 : index
    %c0_15 = arith.constant 0 : index
    %29 = vector.load %arg4[%c0_13, %c0_14, %c0_15] : memref<1x1x16xf32, #tpu.memory_space<vmem>>, vector<1x1x16xf32>
    %30 = vector.shape_cast %29 : vector<1x1x16xf32> to vector<1x16xf32>
    %31 = vector.broadcast %30 : vector<1x16xf32> to vector<8x16xf32>
    %32 = arith.addf %28, %31 : vector<8x16xf32>
    %c0_16 = arith.constant 0 : index
    %c0_17 = arith.constant 0 : index
    %c0_18 = arith.constant 0 : index
    %33 = vector.load %arg6[%c0_16, %c0_17, %c0_18] : memref<1x8x16xf32, #tpu.memory_space<vmem>>, vector<1x8x16xf32>
    %34 = vector.shape_cast %33 : vector<1x8x16xf32> to vector<8x16xf32>
    %35 = vector.shape_cast %32 : vector<8x16xf32> to vector<1x8x16xf32>
    tpu.vector_store %arg6[%c0_16, %c0_17, %c0_18], %35 {strides = array<i32>} : memref<1x8x16xf32, #tpu.memory_space<vmem>>, vector<1x8x16xf32>,
    return
  }
  func.func @transform_0(%arg0: i32, %arg1: i32) -> (i32, i32, i32) {
    %c0_i32 = arith.constant 0 : i32
    %c0_i32_0 = arith.constant 0 : i32
    return %arg0, %arg1, %c0_i32 : i32, i32, i32
  }
  func.func @transform_1(%arg0: i32, %arg1: i32) -> (i32, i32, i32) {
    %c0_i32 = arith.constant 0 : i32
    %c0_i32_0 = arith.constant 0 : i32
    %c0_i32_1 = arith.constant 0 : i32
    return %arg0, %c0_i32, %c0_i32_0 : i32, i32, i32
  }
  func.func @transform_2(%arg0: i32, %arg1: i32) -> (i32, i32, i32) {
    %c0_i32 = arith.constant 0 : i32
    %c0_i32_0 = arith.constant 0 : i32
    %c0_i32_1 = arith.constant 0 : i32
    return %arg0, %c0_i32, %c0_i32_0 : i32, i32, i32
  }
  func.func @transform_3(%arg0: i32, %arg1: i32) -> (i32, i32) {
    %c0_i32 = arith.constant 0 : i32
    %c0_i32_0 = arith.constant 0 : i32
    %c0_i32_1 = arith.constant 0 : i32
    return %c0_i32, %c0_i32_0 : i32, i32
  }
  func.func @transform_4(%arg0: i32, %arg1: i32) -> (i32, i32, i32) {
    %c0_i32 = arith.constant 0 : i32
    %c0_i32_0 = arith.constant 0 : i32
    return %arg0, %arg1, %c0_i32 : i32, i32, i32
  }
}

</mosaic_0001>

<llo_original>
// kernel: tpu_custom_call.1
$region0: #{tpu_custom_call.1}
  #allocation0 [shape = 'u32[]', space=smem, size = 0x4, offset = 0x4, fixed_abs, tag = 'smem constant byte address 0x4 - core index']
  #allocation1 [shape = 'u32[72,128]{1,0:T(1,128)}', space=vmem, size = 0x9000, scoped, tag = 'internal scratch']
  %s0 = inlined_call_operand.vmem [shape: f32[2,8,32], index: 0, kind: input, shape index: {}]
  %s1 = inlined_call_operand.vmem [shape: f32[2,1,32], index: 1, kind: input, shape index: {}]
  %s2 = inlined_call_operand.vmem [shape: f32[2,1,16], index: 2, kind: input, shape index: {}]
  %s3 = inlined_call_operand.vmem [shape: bf16[32,16], index: 3, kind: input, shape index: {}]
  %s4 = inlined_call_operand.hbm [shape: f32[2,8,16], index: 4, kind: output, shape index: {}]
  %s5 = sld [smem:[#allocation0]]
  $region49: #{tpu_custom_call.1} parent=0
    _
  %s7 = ssub.s32 1, %s5
  %s8 = scalar_select 0, %s7, %s5
  $region1: #{tpu_custom_call.1} parent=0
    #allocation2 [shape = 'u8[8192]{0}', space=vmem, size = 0x2000, scoped, tag = 'output window, operand 0']
    #allocation3 [shape = 's32[2]{0}', space=sflag, size = 0x8, scoped, tag = 'scoped memory for tpu_custom_call.1']
    %9 = vsyncpa [#allocation3], 0
    %s10 = scalar_lea.sflag [#allocation3], 1
    %11 = vsyncpa %s10, 0
    loop: start=0, step=1, limit=4
    $region2: #{tpu_custom_call.1} parent=1 // loop_pre_header
      _
    $region3: #{tpu_custom_call.1} parent=1 // loop_header
      %s13 = sphi 0, %s17
      %p14 = scmp.ge.s32.totalorder %s13, 4
      %s20 = sphi 0, %s32
      %s21 = sphi 0, %s28
      %s22 = sphi 0, %s20
      %s23 = sphi 0, %s21
      %s24 = sphi 0, %s22
      %s25 = sphi 0, %s23
      %s37 = sphi 0, %s39
      %s40 = sphi 0, %s37
      %s41 = sphi 0, %s40
      %s57 = sphi 0, %s41
      %s63 = sphi 0, %s65
      %s66 = sphi 0, %s63
      %s67 = sphi 0, %s66
      %s83 = sphi 0, %s67
      %s89 = sphi 0, %s91
      %s92 = sphi 0, %s89
      %s93 = sphi 0, %s92
      %s109 = sphi 0, %s93
      %s113 = sphi 0, %s113
      %s115 = sphi 0, %s113
      %s116 = sphi 0, %s115
      %s130 = sphi 0, %s116
      %s138 = sphi 0, %s140
      %s141 = sphi 0, %s138
      %s142 = sphi 0, %s141
      %s158 = sphi 0, %s142
    $region4: #{tpu_custom_call.1} parent=1 // loop_header_branch
      %16 = sbr.rel (%p14) target = $region8
    $region5: #{tpu_custom_call.1} parent=1 // loop_body
      %s18 = ssub.s32 %s13, 1
      %s19 = ssub.s32 %s13, 2
      %s26 = sadd.s32 1, %s21
      %p27 = scmp.ge.s32.totalorder %s26, 1
      %s28 = scalar_select %p27, 0, %s26
      %s29 = sadd.s32 1, %s20
      %s30 = scalar_select %p27, %s29, %s20
      %p31 = scmp.ge.s32.totalorder %s30, 2
      %s32 = scalar_select %p31, 0, %s30
      %s33 = ssub.s32 %s20, %s32
      %s34 = ssub.s32 %s21, %s28
      %s35 = sor.u32 %s33, %s34
      %p36 = scmp.eq.s32.totalorder %s35, 0
      %s38 = sadd.s32 %s37, 1
      %s39 = scalar_select %p36, %s37, %s38
      %p42 = pneg %p36
      %p43 = scmp.eq.s32.totalorder %s13, 1
      %p44 = por %p42, %p43
      %p45 = scmp.ne.s32.totalorder %s37, %s40
      %p46 = scmp.eq.s32.totalorder %s13, 0
      %p47 = por %p45, %p46
      %p48 = scmp.ne.s32.totalorder %s37, %s40
      %p49 = scmp.eq.s32.totalorder %s18, 1
      %p50 = por %p48, %p49
      %p51 = scmp.ne.s32.totalorder %s40, %s41
      %p52 = scmp.eq.s32.totalorder %s18, 0
      %p53 = por %p51, %p52
      %p54 = scmp.ne.s32.totalorder %s40, %s41
      %p55 = scmp.eq.s32.totalorder %s19, 1
      %p56 = por %p54, %p55
      %p58 = scmp.ne.s32.totalorder %s41, %s57
      %p59 = scmp.eq.s32.totalorder %s19, 0
      %p60 = por %p58, %p59
      %s61 = ssub.s32 %s20, %s32
      %p62 = scmp.eq.s32.totalorder %s61, 0
      %s64 = sadd.s32 %s63, 1
      %s65 = scalar_select %p62, %s63, %s64
      %p68 = pneg %p62
      %p69 = scmp.eq.s32.totalorder %s13, 1
      %p70 = por %p68, %p69
      %p71 = scmp.ne.s32.totalorder %s63, %s66
      %p72 = scmp.eq.s32.totalorder %s13, 0
      %p73 = por %p71, %p72
      %p74 = scmp.ne.s32.totalorder %s63, %s66
      %p75 = scmp.eq.s32.totalorder %s18, 1
      %p76 = por %p74, %p75
      %p77 = scmp.ne.s32.totalorder %s66, %s67
      %p78 = scmp.eq.s32.totalorder %s18, 0
      %p79 = por %p77, %p78
      %p80 = scmp.ne.s32.totalorder %s66, %s67
      %p81 = scmp.eq.s32.totalorder %s19, 1
      %p82 = por %p80, %p81
      %p84 = scmp.ne.s32.totalorder %s67, %s83
      %p85 = scmp.eq.s32.totalorder %s19, 0
      %p86 = por %p84, %p85
      %s87 = ssub.s32 %s20, %s32
      %p88 = scmp.eq.s32.totalorder %s87, 0
      %s90 = sadd.s32 %s89, 1
      %s91 = scalar_select %p88, %s89, %s90
      %p94 = pneg %p88
      %p95 = scmp.eq.s32.totalorder %s13, 1
      %p96 = por %p94, %p95
      %p97 = scmp.ne.s32.totalorder %s89, %s92
      %p98 = scmp.eq.s32.totalorder %s13, 0
      %p99 = por %p97, %p98
      %p100 = scmp.ne.s32.totalorder %s89, %s92
      %p101 = scmp.eq.s32.totalorder %s18, 1
      %p102 = por %p100, %p101
      %p103 = scmp.ne.s32.totalorder %s92, %s93
      %p104 = scmp.eq.s32.totalorder %s18, 0
      %p105 = por %p103, %p104
      %p106 = scmp.ne.s32.totalorder %s92, %s93
      %p107 = scmp.eq.s32.totalorder %s19, 1
      %p108 = por %p106, %p107
      %p110 = scmp.ne.s32.totalorder %s93, %s109
      %p111 = scmp.eq.s32.totalorder %s19, 0
      %p112 = por %p110, %p111
      %s114 = sadd.s32 %s113, 1
      %p117 = scmp.eq.s32.totalorder %s13, 1
      %p118 = scmp.ne.s32.totalorder %s113, %s115
      %p119 = scmp.eq.s32.totalorder %s13, 0
      %p120 = por %p118, %p119
      %p121 = scmp.ne.s32.totalorder %s113, %s115
      %p122 = scmp.eq.s32.totalorder %s18, 1
      %p123 = por %p121, %p122
      %p124 = scmp.ne.s32.totalorder %s115, %s116
      %p125 = scmp.eq.s32.totalorder %s18, 0
      %p126 = por %p124, %p125
      %p127 = scmp.ne.s32.totalorder %s115, %s116
      %p128 = scmp.eq.s32.totalorder %s19, 1
      %p129 = por %p127, %p128
      %p131 = scmp.ne.s32.totalorder %s116, %s130
      %p132 = scmp.eq.s32.totalorder %s19, 0
      %p133 = por %p131, %p132
      %s134 = ssub.s32 %s20, %s32
      %s135 = ssub.s32 %s21, %s28
      %s136 = sor.u32 %s134, %s135
      %p137 = scmp.eq.s32.totalorder %s136, 0
      %s139 = sadd.s32 %s138, 1
      %s140 = scalar_select %p137, %s138, %s139
      %p143 = pneg %p137
      %p144 = scmp.eq.s32.totalorder %s13, 1
      %p145 = por %p143, %p144
      %p146 = scmp.ne.s32.totalorder %s138, %s141
      %p147 = scmp.eq.s32.totalorder %s13, 0
      %p148 = por %p146, %p147
      %p149 = scmp.ne.s32.totalorder %s138, %s141
      %p150 = scmp.eq.s32.totalorder %s18, 1
      %p151 = por %p149, %p150
      %p152 = scmp.ne.s32.totalorder %s141, %s142
      %p153 = scmp.eq.s32.totalorder %s18, 0
      %p154 = por %p152, %p153
      %p155 = scmp.ne.s32.totalorder %s141, %s142
      %p156 = scmp.eq.s32.totalorder %s19, 1
      %p157 = por %p155, %p156
      %p159 = scmp.ne.s32.totalorder %s142, %s158
      %p160 = scmp.eq.s32.totalorder %s19, 0
      %p161 = por %p159, %p160
      %p162 = scmp.le.s32.totalorder 1, %s13
      %p163 = scmp.lt.s32.totalorder %s13, 3
      %p164 = pnand %p162, %p163
      %p165 = pneg %p164
      // Predicated region
      $region9: #{tpu_custom_call.1} parent=5 // pred_check
        _
      $region10: #{tpu_custom_call.1} parent=5 // pred_check_branch
        %167 = sbr.rel (%p164) target = $region12
      $region11: #{tpu_custom_call.1} parent=5 // pred_region
        %s168 = ssub.s32 %s13, 1
        // Predicated region
        $region13: #{tpu_custom_call.1} parent=11 // pred_check
          %p169 = pneg %p126
        $region14: #{tpu_custom_call.1} parent=11 // pred_check_branch
          %171 = sbr.rel (%p169) target = $region16
        $region15: #{tpu_custom_call.1} parent=11 // pred_region
          _
        $region16: #{tpu_custom_call.1} parent=11 // pred_fallthru
          _
      $region12: #{tpu_custom_call.1} parent=5 // pred_fallthru
        _
      %p172 = scmp.lt.s32.totalorder %s13, 2
      // Predicated region
      $region17: #{tpu_custom_call.1} parent=5 // pred_check
        %p173 = pneg %p172
      $region18: #{tpu_custom_call.1} parent=5 // pred_check_branch
        %175 = sbr.rel (%p173) target = $region20
      $region19: #{tpu_custom_call.1} parent=5 // pred_region
        // Predicated region
        $region21: #{tpu_custom_call.1} parent=19 // pred_check
          %p176 = pneg %p47
        $region22: #{tpu_custom_call.1} parent=19 // pred_check_branch
          %178 = sbr.rel (%p176) target = $region24
        $region23: #{tpu_custom_call.1} parent=19 // pred_region
          %p179 = scmp.lt.s32.totalorder %s20, 1
          %s180 = scalar_select %p179, %s20, 1
          %p181 = scmp.lt.s32.totalorder %s21, 0
          %s182 = scalar_select %p181, %s21, 0
          %s183 = sadd.s32 %s182, %s180
          %s184 = smul.addr %s183, 8
          %s185 = scalar_lea.vmem %s0, %s184
        $region24: #{tpu_custom_call.1} parent=19 // pred_fallthru
          _
        // Predicated region
        $region25: #{tpu_custom_call.1} parent=19 // pred_check
          %p186 = pneg %p73
        $region26: #{tpu_custom_call.1} parent=19 // pred_check_branch
          %188 = sbr.rel (%p186) target = $region28
        $region27: #{tpu_custom_call.1} parent=19 // pred_region
          %p189 = scmp.lt.s32.totalorder %s20, 1
          %s190 = scalar_select %p189, %s20, 1
          %s191 = scalar_lea.vmem %s1, %s190
        $region28: #{tpu_custom_call.1} parent=19 // pred_fallthru
          _
        // Predicated region
        $region29: #{tpu_custom_call.1} parent=19 // pred_check
          %p192 = pneg %p99
        $region30: #{tpu_custom_call.1} parent=19 // pred_check_branch
          %194 = sbr.rel (%p192) target = $region32
        $region31: #{tpu_custom_call.1} parent=19 // pred_region
          %p195 = scmp.lt.s32.totalorder %s20, 1
          %s196 = scalar_select %p195, %s20, 1
          %s197 = scalar_lea.vmem %s2, %s196
        $region32: #{tpu_custom_call.1} parent=19 // pred_fallthru
          _
      $region20: #{tpu_custom_call.1} parent=5 // pred_fallthru
        _
      %p198 = scmp.le.s32.totalorder 1, %s13
      %p199 = scmp.lt.s32.totalorder %s13, 3
      %p200 = pnand %p198, %p199
      %p201 = pneg %p200
      // Predicated region
      $region33: #{tpu_custom_call.1} parent=5 // pred_check
        _
      $region34: #{tpu_custom_call.1} parent=5 // pred_check_branch
        %203 = sbr.rel (%p200) target = $region36
      $region35: #{tpu_custom_call.1} parent=5 // pred_region
        %s204 = ssub.s32 %s13, 1
        %p205 = scmp.lt.s32.totalorder %s22, 1
        %s206 = scalar_select %p205, %s22, 1
        %p207 = scmp.lt.s32.totalorder %s23, 0
        %s208 = scalar_select %p207, %s23, 0
        %s209 = sadd.s32 %s208, %s206
        %s210 = smul.addr %s209, 8
        %s211 = scalar_lea.vmem %s0, %s210
        %p212 = pneg %p53
        %p213 = pneg %p50
        %p214 = scmp.lt.s32.totalorder %s22, 1
        %s215 = scalar_select %p214, %s22, 1
        %s216 = scalar_lea.vmem %s1, %s215
        %p217 = pneg %p79
        %p218 = pneg %p76
        %p219 = scmp.lt.s32.totalorder %s22, 1
        %s220 = scalar_select %p219, %s22, 1
        %s221 = scalar_lea.vmem %s2, %s220
        %p222 = pneg %p105
        %p223 = pneg %p102
        %p224 = pneg %p126
        %p225 = pneg %p123
        %p226 = pneg %p154
        %p227 = pneg %p151
        %s228 = sand.u32 %s141, 1
        %s229 = scalar_lea.sflag [#allocation3], %s228
        %s230 = sand.u32 %s141, 1
        %s231 = smul.addr %s230, 8
        %s232 = scalar_lea.vmem [#allocation2], %s231
        %p233 = scmp.lt.s32.totalorder %s22, 1
        %s234 = scalar_select %p233, %s22, 1
        %p235 = scmp.lt.s32.totalorder %s23, 0
        %s236 = scalar_select %p235, %s23, 0
        %s237 = sadd.s32 %s236, %s234
        %s238 = smul.addr %s237, 8
        %s239 = scalar_lea.vmem %s0, %s238
        %p240 = scmp.lt.s32.totalorder %s22, 1
        %s241 = scalar_select %p240, %s22, 1
        %s242 = scalar_lea.vmem %s1, %s241
        %p243 = scmp.lt.s32.totalorder %s22, 1
        %s244 = scalar_select %p243, %s22, 1
        %s245 = scalar_lea.vmem %s2, %s244
        %v247 = vld [vmem:[%s239] sm:$0xff]
        %vm248 = vcmask 261120
        %v249 = vsel %vm248, %v247, 0.0
        %250 = vadd.xlane.f32.xlu0 %v249
        %v251 = vpop.xlane.xlu0 %250
        %v252 = vmul.f32 %v251, 0.03125
        %v253 = vmul.f32 %v247, %v247
        %v254 = vsel %vm248, %v253, 0.0
        %255 = vadd.xlane.f32.xlu0 %v254
        %v256 = vpop.xlane.xlu0 %255
        %v257 = vmul.f32 %v256, 0.03125
        %v258 = vmul.f32 %v252, %v252
        %v259 = vsub.f32 %v257, %v258
        %v260 = vmax.f32 %v259, 0.0
        %v261 = vsub.f32 %v247, %v252
        %v262 = vadd.f32 %v260, 1e-06
        %v263 = vrsqrt.pop %v262
        %v264 = vmul.f32 %v263, %v262
        %v265 = vmul.f32 %v264, %v263
        %v266 = vmul.f32 0.5, %v265
        %v267 = vsub.f32 1.5, %v266
        %v268 = vmul.f32 %v263, %v267
        %vm269 = vweird.f32 %v262
        %vm270 = vweird.f32 %v263
        %vm271 = vmor %vm269, %vm270
        %v272 = vsel %vm271, %v263, %v268
        %v273 = vmul.f32 %v261, %v272
        %v274 = vld [vmem:[%s242] sm:$0x1]
        %v276 = vperm.slane %v274, 0
        %v278 = vmul.f32 %v273, %v276
        %v279 = vpack.c.bf16 %v278, %v278
        %v280 = vld [vmem:[%s3] sm:$0xf]
        %v281 = vld [vmem:[%s3 + $0x4] sm:$0xf]
        %v282 = vld [vmem:[%s3 + $0x8] sm:$0xf]
        %v283 = vld [vmem:[%s3 + $0xc] sm:$0xf]
        %v284 = vld [vmem:[%s245] sm:$0x1]
        %v286 = vperm.slane %v284, 0
        %v292 = vunpack.c.l.b16 %v280
        %v293 = vunpack.c.l.b16 %v281
        %v294 = vunpack.c.l.b16 %v282
        %v295 = vunpack.c.l.b16 %v283
        %v296 = vpack.c.b16 %v293, %v292
        %v297 = vpack.c.b16 %v295, %v294
        %v301 = vsel %vm248, %v279, 0
        %303 = vmatpush.bf16.msra.mxu0 0
        %304 = vmatpush.bf16.msra.mxu0 0
        %305 = vmatpush.bf16.msra.mxu0 0
        %306 = vmatpush.bf16.msra.mxu0 0
        %307 = vmatpush.bf16.msra.mxu0 0
        %308 = vmatpush.bf16.msra.mxu0 0
        %309 = vmatpush.bf16.msra.mxu0 %v297
        %310 = vmatpush.bf16.msra.mxu0 %v296
        %311 = vmatmul.bf16.gmra.mxu0 %v301
        %v312 = vpop.f32.mrf.mxu0
        %v313 = vadd.f32 %v286, %v312
        %v314 = vpop.f32.mrf.mxu0
        %315 = vdwg.mxu0
        %vm316 = vcmask 130048
        %317 = vst.msk [vmem:[%s232] sm:$0xff] %vm316, %v313
        %s318 = sand.u32 %s141, 1
        %s319 = scalar_lea.sflag [#allocation3], %s318
        %s320 = sand.u32 %s141, 1
        %s321 = smul.addr %s320, 8
        %s322 = scalar_lea.vmem [#allocation2], %s321
        // Predicated region
        $region37: #{tpu_custom_call.1} parent=35 // pred_check
          %p323 = pneg %p151
        $region38: #{tpu_custom_call.1} parent=35 // pred_check_branch
          %325 = sbr.rel (%p323) target = $region40
        $region39: #{tpu_custom_call.1} parent=35 // pred_region
          %327 = vsyncadd %s319, 0
          %s328 = sadd.s32 %s23, %s22
          %s329 = smul.addr %s328, 8
          %s330 = scalar_lea.hbm %s4, %s329
          %s332 = sshll.u32 %s322, 4
          %s333 = int_to_ptr.vmem [resolvable:$true] %s332
          %s334 = sshll.u32 %s330, 4
          %s335 = int_to_ptr.hbm [resolvable:$true] %s334
          %337 = dma.vmem_to_hbm [thread:$0]  %s333, 128, %s335, %s319
        $region40: #{tpu_custom_call.1} parent=35 // pred_fallthru
          _
      $region36: #{tpu_custom_call.1} parent=5 // pred_fallthru
        _
      %p338 = scmp.le.s32.totalorder 2, %s13
      // Predicated region
      $region41: #{tpu_custom_call.1} parent=5 // pred_check
        %p339 = pneg %p338
      $region42: #{tpu_custom_call.1} parent=5 // pred_check_branch
        %341 = sbr.rel (%p339) target = $region44
      $region43: #{tpu_custom_call.1} parent=5 // pred_region
        %s342 = ssub.s32 %s13, 2
        // Predicated region
        $region45: #{tpu_custom_call.1} parent=43 // pred_check
          %p343 = pneg %p157
        $region46: #{tpu_custom_call.1} parent=43 // pred_check_branch
          %345 = sbr.rel (%p343) target = $region48
        $region47: #{tpu_custom_call.1} parent=43 // pred_region
          %s346 = sand.u32 %s142, 1
          %s347 = scalar_lea.sflag [#allocation3], %s346
          %s348 = sand.u32 %s142, 1
          %s349 = smul.addr %s348, 8
          %s350 = scalar_lea.vmem [#allocation2], %s349
          %352 = dma.done %s347, 128
        $region48: #{tpu_custom_call.1} parent=43 // pred_fallthru
          _
      $region44: #{tpu_custom_call.1} parent=5 // pred_fallthru
        _
    $region6: #{tpu_custom_call.1} parent=1 // loop_footer
      %s17 = sadd.s32 1, %s13
    $region7: #{tpu_custom_call.1} parent=1 // loop_footer_branch
      %12 = sbr.rel target = $region3
    $region8: #{tpu_custom_call.1} parent=1 // loop_exit
      _
    %353 = vsyncpa [#allocation3], 1
    %s354 = scalar_lea.sflag [#allocation3], 1
    %355 = vsyncpa %s354, 1

</llo_original>
